<compile_context>
chip_gen: v5e
topology: v5e:2x2
jax: 0.10.0
libtpu: 0.0.40
codegen_flags: <defaults>
</compile_context>

<pallas_src>
import functools
import warnings

import jax
import jax.numpy as jnp
from jax.experimental import pallas as pl
from jax.experimental.pallas import tpu as pltpu


# ---------------------------------------------------------------------------
# Primary path: zero-byte identity (no DMA, output aliases the input buffer).
# ---------------------------------------------------------------------------
def _identity_noop_kernel(x_ref, o_ref):
    # x_ref and o_ref are the SAME HBM buffer (input_output_aliases={0: 0}).
    # No DMA, no compute: just pin a read+write dependency on the aliased
    # output so the call is not dead-code-eliminated and the result is
    # considered produced by this kernel.
    del x_ref
    pltpu.touch(o_ref)


@functools.partial(jax.jit, donate_argnums=0)
def _identity_zero_copy(batch: jax.Array) -> jax.Array:
    return pl.pallas_call(
        _identity_noop_kernel,
        out_shape=jax.ShapeDtypeStruct(batch.shape, batch.dtype),
        in_specs=[pl.BlockSpec(memory_space=pl.ANY)],   # stay in HBM, no auto-DMA
        out_specs=pl.BlockSpec(memory_space=pl.ANY),
        input_output_aliases={0: 0},
        cost_estimate=pl.CostEstimate(
            flops=0, transcendentals=0, bytes_accessed=0),
    )(batch)


# ---------------------------------------------------------------------------
# Fallback path: lane-dense tiled copy (only used if the no-op path fails to
# compile on some backend).  Heuristics fixed per review.
# ---------------------------------------------------------------------------
def _copy_kernel(x_ref, o_ref):
    o_ref[...] = x_ref[...]


def _pick_tile_rows(rows: int, itemsize: int, target_bytes: int = 2 << 20) -> int:
    """Largest multiple-of-8 divisor of `rows` with tile <= target_bytes.

    Also capped at rows//2 (when rows % 16 == 0) so the grid has >= 2 steps
    and both v7x TensorCores participate.
    """
    if rows <= 8:
        return rows                                   # full extent: always legal
    max_rows = max(8, target_bytes // (128 * itemsize))
    if rows % 16 == 0:
        max_rows = min(max_rows, rows // 2)           # keep grid >= 2 (v7x)
    best = None
    cand = 8
    limit = min(max_rows, rows)
    while cand <= limit:
        if rows % cand == 0:
            best = cand
        cand += 8
    if best is None:
        # rows not a multiple of 8: whole-array block (small shapes only here).
        # TODO(synk): split into an 8-aligned prefix + remainder for huge odd shapes.
        return rows
    return best


@functools.partial(jax.jit, donate_argnums=0)
def _identity_tiled_copy(batch: jax.Array) -> jax.Array:
    orig_shape = batch.shape
    total = batch.size
    itemsize = jnp.dtype(batch.dtype).itemsize
    cost = pl.CostEstimate(
        flops=0, transcendentals=0, bytes_accessed=2 * total * itemsize)

    if total % 128 != 0:
        # Tiny/odd element counts: single whole-array block copy (still aliased).
        return pl.pallas_call(
            _copy_kernel,
            out_shape=jax.ShapeDtypeStruct(orig_shape, batch.dtype),
            input_output_aliases={0: 0},
            cost_estimate=cost,
        )(batch)

    rows = total // 128
    tile_rows = _pick_tile_rows(rows, itemsize)
    x2d = batch.reshape(rows, 128)                    # contiguous row-major bitcast

    out2d = pl.pallas_call(
        _copy_kernel,
        out_shape=jax.ShapeDtypeStruct((rows, 128), batch.dtype),
        grid=(rows // tile_rows,),
        in_specs=[pl.BlockSpec((tile_rows, 128), lambda i: (i, 0))],
        out_specs=pl.BlockSpec((tile_rows, 128), lambda i: (i, 0)),
        input_output_aliases={0: 0},
        compiler_params=pltpu.CompilerParams(
            dimension_semantics=("parallel",)),
        cost_estimate=cost,
    )(x2d)
    return out2d.reshape(orig_shape)


# ---------------------------------------------------------------------------
# Public wrapper.
# ---------------------------------------------------------------------------
def identity_proj(batch: jax.Array) -> jax.Array:
    """Pallas identity projection: (b, t, c, h, w) -> same values, same shape."""
    try:
        return _identity_zero_copy(batch)
    except Exception:
        # Compile-time failure of the zero-copy path leaves `batch` intact;
        # fall back to the explicit tiled copy.
        return _identity_tiled_copy(batch)


if __name__ == "__main__":
    key = jax.random.PRNGKey(0)
    # Small shapes consistent with the module's documented (b, t, c, h, w) input.
    b, t, c, h, w = 2, 3, 4, 16, 16
    batch = jax.random.normal(key, (b, t, c, h, w), dtype=jnp.float32)
    expected = jax.device_get(batch)  # host copy; device buffer is donated below

    with warnings.catch_warnings():
        # Donation advisory (if any) is harmless here; suppress it locally only.
        warnings.filterwarnings(
            "ignore", message="Some donated buffers were not usable")
        y = identity_proj(batch)
        y = jax.block_until_ready(y)

    assert y.shape == expected.shape
    assert y.dtype == expected.dtype
    assert bool(jnp.array_equal(y, jnp.asarray(expected)))

    print("KERNEL_OK")
</pallas_src>

<mosaic_0001>
module attributes {stable_mosaic.version = 11 : i64} {
  func.func @_identity_noop_kernel(%arg0: memref<2x3x4x16x16xf32, #tpu.memory_space<any>>, %arg1: memref<2x3x4x16x16xf32, #tpu.memory_space<any>>) attributes {dimension_semantics = [], scalar_prefetch = 0 : i64, scratch_operands = 0 : i64, tpu.core_type = #tpu.core_type<tc>} {
    return
  }
}

module attributes {stable_mosaic.version = 11 : i64} {
  func.func @_copy_kernel(%arg0: i32, %arg1: memref<24x128xf32, #tpu.memory_space<vmem>>, %arg2: memref<24x128xf32, #tpu.memory_space<vmem>>) attributes {dimension_semantics = [#tpu.dimension_semantics<parallel>], iteration_bounds = array<i64: 2>, scalar_prefetch = 0 : i64, scratch_operands = 0 : i64, tpu.core_type = #tpu.core_type<tc>, window_params = [{transform_indices = @transform_0, window_bounds = array<i64: 24, 128>}, {transform_indices = @transform_1, window_bounds = array<i64: 24, 128>}]} {
    %c0 = arith.constant 0 : index
    %c0_0 = arith.constant 0 : index
    %0 = vector.load %arg1[%c0, %c0_0] : memref<24x128xf32, #tpu.memory_space<vmem>>, vector<24x128xf32>
    %c0_1 = arith.constant 0 : index
    %c0_2 = arith.constant 0 : index
    %1 = vector.load %arg2[%c0_1, %c0_2] : memref<24x128xf32, #tpu.memory_space<vmem>>, vector<24x128xf32>
    tpu.vector_store %arg2[%c0_1, %c0_2], %0 {strides = array<i32>} : memref<24x128xf32, #tpu.memory_space<vmem>>, vector<24x128xf32>,
    return
  }
  func.func @transform_0(%arg0: i32) -> (i32, i32) {
    %c0_i32 = arith.constant 0 : i32
    %c0_i32_0 = arith.constant 0 : i32
    return %arg0, %c0_i32 : i32, i32
  }
  func.func @transform_1(%arg0: i32) -> (i32, i32) {
    %c0_i32 = arith.constant 0 : i32
    %c0_i32_0 = arith.constant 0 : i32
    return %arg0, %c0_i32 : i32, i32
  }
}

</mosaic_0001>

<llo_original>
// kernel: _identity_zero_copy.1
$region0: #{_identity_zero_copy.1}
  #allocation0 [shape = 'u32[]', space=smem, size = 0x4, offset = 0x4, fixed_abs, tag = 'smem constant byte address 0x4 - core index']
  #allocation1 [shape = 'u32[72,128]{1,0:T(1,128)}', space=vmem, size = 0x9000, scoped, tag = 'internal scratch']
  %s0 = inlined_call_operand.hbm [shape: f32[2,3,4,16,16], index: 0, kind: input, shape index: {}, may-alias: {0,1}]
  %s1 = inlined_call_operand.hbm [shape: f32[2,3,4,16,16], index: 1, kind: output, shape index: {}, may-alias: {0,1}]
  %s2 = sld [smem:[#allocation0]]
  $region2: #{_identity_zero_copy.1} parent=0
    _
  %s4 = ssub.s32 1, %s2
  %s5 = scalar_select 0, %s4, %s2

// kernel: _identity_tiled_copy.1
$region0: #{_identity_tiled_copy.1}
  #allocation0 [shape = 'u32[]', space=smem, size = 0x4, offset = 0x4, fixed_abs, tag = 'smem constant byte address 0x4 - core index']
  #allocation1 [shape = 'u32[72,128]{1,0:T(1,128)}', space=vmem, size = 0x9000, scoped, tag = 'internal scratch']
  %s0 = inlined_call_operand.vmem [shape: f32[48,128], index: 0, kind: input, shape index: {}, may-alias: {0,1}]
  %s1 = inlined_call_operand.vmem [shape: f32[48,128], index: 1, kind: output, shape index: {}, may-alias: {0,1}]
  %s2 = sld [smem:[#allocation0]]
  $region37: #{_identity_tiled_copy.1} parent=0
    _
  %s4 = ssub.s32 1, %s2
  %s5 = scalar_select 0, %s4, %s2
  loop: start=0, step=1, limit=4
  $region2: #{_identity_tiled_copy.1} parent=0 // loop_pre_header
    _
  $region3: #{_identity_tiled_copy.1} parent=0 // loop_header
    %s7 = sphi 0, %s11
    %p8 = scmp.ge.s32.totalorder %s7, 4
    %s17 = sphi 0, %s19
    %s20 = sphi 0, %s17
    %s21 = sphi 0, %s20
    %s37 = sphi 0, %s21
    %s43 = sphi 0, %s45
    %s46 = sphi 0, %s43
    %s47 = sphi 0, %s46
    %s63 = sphi 0, %s47
  $region4: #{_identity_tiled_copy.1} parent=0 // loop_header_branch
    %10 = sbr.rel (%p8) target = $region8
  $region5: #{_identity_tiled_copy.1} parent=0 // loop_body
    %s12 = ssub.s32 %s7, 1
    %s13 = ssub.s32 %s7, 2
    %s14 = sadd.s32 %s7, 1
    %s15 = ssub.s32 %s7, %s14
    %p16 = scmp.eq.s32.totalorder %s15, 0
    %s18 = sadd.s32 %s17, 1
    %s19 = scalar_select %p16, %s17, %s18
    %p22 = pneg %p16
    %p23 = scmp.eq.s32.totalorder %s7, 1
    %p24 = por %p22, %p23
    %p25 = scmp.ne.s32.totalorder %s17, %s20
    %p26 = scmp.eq.s32.totalorder %s7, 0
    %p27 = por %p25, %p26
    %p28 = scmp.ne.s32.totalorder %s17, %s20
    %p29 = scmp.eq.s32.totalorder %s12, 1
    %p30 = por %p28, %p29
    %p31 = scmp.ne.s32.totalorder %s20, %s21
    %p32 = scmp.eq.s32.totalorder %s12, 0
    %p33 = por %p31, %p32
    %p34 = scmp.ne.s32.totalorder %s20, %s21
    %p35 = scmp.eq.s32.totalorder %s13, 1
    %p36 = por %p34, %p35
    %p38 = scmp.ne.s32.totalorder %s21, %s37
    %p39 = scmp.eq.s32.totalorder %s13, 0
    %p40 = por %p38, %p39
    %s41 = ssub.s32 %s7, %s14
    %p42 = scmp.eq.s32.totalorder %s41, 0
    %s44 = sadd.s32 %s43, 1
    %s45 = scalar_select %p42, %s43, %s44
    %p48 = pneg %p42
    %p49 = scmp.eq.s32.totalorder %s7, 1
    %p50 = por %p48, %p49
    %p51 = scmp.ne.s32.totalorder %s43, %s46
    %p52 = scmp.eq.s32.totalorder %s7, 0
    %p53 = por %p51, %p52
    %p54 = scmp.ne.s32.totalorder %s43, %s46
    %p55 = scmp.eq.s32.totalorder %s12, 1
    %p56 = por %p54, %p55
    %p57 = scmp.ne.s32.totalorder %s46, %s47
    %p58 = scmp.eq.s32.totalorder %s12, 0
    %p59 = por %p57, %p58
    %p60 = scmp.ne.s32.totalorder %s46, %s47
    %p61 = scmp.eq.s32.totalorder %s13, 1
    %p62 = por %p60, %p61
    %p64 = scmp.ne.s32.totalorder %s47, %s63
    %p65 = scmp.eq.s32.totalorder %s13, 0
    %p66 = por %p64, %p65
    %p67 = scmp.le.s32.totalorder 1, %s7
    %p68 = scmp.lt.s32.totalorder %s7, 3
    %p69 = pnand %p67, %p68
    %p70 = pneg %p69
    // Predicated region
    $region9: #{_identity_tiled_copy.1} parent=5 // pred_check
      _
    $region10: #{_identity_tiled_copy.1} parent=5 // pred_check_branch
      %72 = sbr.rel (%p69) target = $region12
    $region11: #{_identity_tiled_copy.1} parent=5 // pred_region
      %s73 = ssub.s32 %s7, 1
    $region12: #{_identity_tiled_copy.1} parent=5 // pred_fallthru
      _
    %p74 = scmp.lt.s32.totalorder %s7, 2
    // Predicated region
    $region13: #{_identity_tiled_copy.1} parent=5 // pred_check
      %p75 = pneg %p74
    $region14: #{_identity_tiled_copy.1} parent=5 // pred_check_branch
      %77 = sbr.rel (%p75) target = $region16
    $region15: #{_identity_tiled_copy.1} parent=5 // pred_region
      // Predicated region
      $region17: #{_identity_tiled_copy.1} parent=15 // pred_check
        %p78 = pneg %p27
      $region18: #{_identity_tiled_copy.1} parent=15 // pred_check_branch
        %80 = sbr.rel (%p78) target = $region20
      $region19: #{_identity_tiled_copy.1} parent=15 // pred_region
        %s81 = smul.u32 3, %s7
        %p82 = scmp.lt.s32.totalorder %s81, 5
        %s83 = scalar_select %p82, %s81, 5
        %s84 = smul.addr %s83, 8
        %s85 = scalar_lea.vmem %s0, %s84
        %s86 = smul.u32 3, %s7
      $region20: #{_identity_tiled_copy.1} parent=15 // pred_fallthru
        _
    $region16: #{_identity_tiled_copy.1} parent=5 // pred_fallthru
      _
    %p87 = scmp.le.s32.totalorder 1, %s7
    %p88 = scmp.lt.s32.totalorder %s7, 3
    %p89 = pnand %p87, %p88
    %p90 = pneg %p89
    // Predicated region
    $region21: #{_identity_tiled_copy.1} parent=5 // pred_check
      _
    $region22: #{_identity_tiled_copy.1} parent=5 // pred_check_branch
      %92 = sbr.rel (%p89) target = $region24
    $region23: #{_identity_tiled_copy.1} parent=5 // pred_region
      %s93 = ssub.s32 %s7, 1
      %s94 = smul.u32 3, %s12
      %p95 = scmp.lt.s32.totalorder %s94, 5
      %s96 = scalar_select %p95, %s94, 5
      %s97 = smul.addr %s96, 8
      %s98 = scalar_lea.vmem %s0, %s97
      %p99 = pneg %p33
      %p100 = pneg %p30
      %p101 = pneg %p59
      %p102 = pneg %p56
      %s103 = smul.u32 3, %s12
      %p104 = scmp.lt.s32.totalorder %s103, 5
      %s105 = scalar_select %p104, %s103, 5
      %s106 = smul.addr %s105, 8
      %s107 = scalar_lea.vmem %s1, %s106
      %s108 = smul.u32 3, %s12
      %p109 = scmp.lt.s32.totalorder %s108, 5
      %s110 = scalar_select %p109, %s108, 5
      %s111 = smul.addr %s110, 8
      %s112 = scalar_lea.vmem %s0, %s111
      %s113 = smul.u32 3, %s12
      %s114 = smul.u32 3, %s12
      %p115 = scmp.lt.s32.totalorder %s114, 5
      %s116 = scalar_select %p115, %s114, 5
      %s117 = smul.addr %s116, 8
      %s118 = scalar_lea.vmem %s1, %s117
      %s119 = smul.u32 3, %s12
      %v120 = vld [vmem:[%s112] sm:$0xff]
      %v121 = vld [vmem:[%s112 + $0x8] sm:$0xff]
      %v122 = vld [vmem:[%s112 + $0x10] sm:$0xff]
      %123 = vst [vmem:[%s118] sm:$0xff] %v120
      %124 = vst [vmem:[%s118 + $0x8] sm:$0xff] %v121
      %125 = vst [vmem:[%s118 + $0x10] sm:$0xff] %v122
      %s126 = smul.u32 3, %s12
      %p127 = scmp.lt.s32.totalorder %s126, 5
      %s128 = scalar_select %p127, %s126, 5
      %s129 = smul.addr %s128, 8
      %s130 = scalar_lea.vmem %s1, %s129
      // Predicated region
      $region25: #{_identity_tiled_copy.1} parent=23 // pred_check
        %p131 = pneg %p56
      $region26: #{_identity_tiled_copy.1} parent=23 // pred_check_branch
        %133 = sbr.rel (%p131) target = $region28
      $region27: #{_identity_tiled_copy.1} parent=23 // pred_region
        %s134 = smul.u32 3, %s12
      $region28: #{_identity_tiled_copy.1} parent=23 // pred_fallthru
        _
    $region24: #{_identity_tiled_copy.1} parent=5 // pred_fallthru
      _
    %p135 = scmp.le.s32.totalorder 2, %s7
    // Predicated region
    $region29: #{_identity_tiled_copy.1} parent=5 // pred_check
      %p136 = pneg %p135
    $region30: #{_identity_tiled_copy.1} parent=5 // pred_check_branch
      %138 = sbr.rel (%p136) target = $region32
    $region31: #{_identity_tiled_copy.1} parent=5 // pred_region
      %s139 = ssub.s32 %s7, 2
      // Predicated region
      $region33: #{_identity_tiled_copy.1} parent=31 // pred_check
        %p140 = pneg %p62
      $region34: #{_identity_tiled_copy.1} parent=31 // pred_check_branch
        %142 = sbr.rel (%p140) target = $region36
      $region35: #{_identity_tiled_copy.1} parent=31 // pred_region
        %s143 = smul.u32 3, %s13
        %p144 = scmp.lt.s32.totalorder %s143, 5
        %s145 = scalar_select %p144, %s143, 5
        %s146 = smul.addr %s145, 8
        %s147 = scalar_lea.vmem %s1, %s146
      $region36: #{_identity_tiled_copy.1} parent=31 // pred_fallthru
        _
    $region32: #{_identity_tiled_copy.1} parent=5 // pred_fallthru
      _
  $region6: #{_identity_tiled_copy.1} parent=0 // loop_footer
    %s11 = sadd.s32 1, %s7
  $region7: #{_identity_tiled_copy.1} parent=0 // loop_footer_branch
    %6 = sbr.rel target = $region3
  $region8: #{_identity_tiled_copy.1} parent=0 // loop_exit
    _

</llo_original>
